<compile_context>
chip_gen: v7x
topology: tpu7x:2x2x1
jax: 0.10.0
libtpu: 0.0.40
codegen_flags: <defaults>
</compile_context>

<pallas_src>
import jax
import jax.numpy as jnp
from jax.experimental import pallas as pl
from jax.experimental.pallas import tpu as pltpu


def ffn_kernel(x_ref, w1_ref, b1_ref, w2_ref, b2_ref, o_ref, acc_ref):
    # x_ref: (tm, E) bf16     w1_ref: (E, th) bf16    b1_ref: (1, th) f32
    # w2_ref: (th, E) bf16    b2_ref: (1, E)  f32
    # o_ref: (tm, E) f32      acc_ref: (tm, E) f32 scratch (persists across k)
    k = pl.program_id(1)

    @pl.when(k == 0)
    def _init():
        acc_ref[...] = jnp.zeros_like(acc_ref)

    # First projection for this hidden chunk: bf16 x bf16 -> f32 accumulate,
    # bias add + ReLU in f32.
    h = jnp.dot(x_ref[...], w1_ref[...], preferred_element_type=jnp.float32)
    h = jnp.maximum(h + b1_ref[...], 0.0)

    # Second projection: accumulate this hidden chunk's contribution.
    acc_ref[...] += jnp.dot(h.astype(w2_ref.dtype), w2_ref[...],
                            preferred_element_type=jnp.float32)

    @pl.when(k == pl.num_programs(1) - 1)
    def _finalize():
        # TODO(synk): Dropout is eval-mode identity here. Training-mode dropout
        # would use pltpu.prng_seed + pltpu.prng_random_bits and 1/(1-p) scaling.
        o_ref[...] = (acc_ref[...] + b2_ref[...]).astype(o_ref.dtype)


def feed_forward(x, w1, b1, w2, b2, *, tm=256, th=512):
    """x: (B, T, E) f32, w1: (E, 4E), b1: (4E,), w2: (4E, E), b2: (E,).

    Returns (B, T, E) f32. Matmuls run in bf16 with f32 accumulation.
    """
    B, T, E = x.shape
    H = w1.shape[1]
    # Lane-dense output requirement; sub-128 embed dims should be padded by the
    # caller (otherwise masked partial stores waste 3/4+ of every vreg lane).
    assert E % 128 == 0, "embed_dim must be a multiple of 128"
    th = min(th, H)
    assert H % th == 0, "hidden tile must divide 4*embed_dim"

    M = B * T
    # Clamp the row tile for tiny inputs; pad rows up to a tile multiple so any
    # (B, T) works without shrinking tm (padded rows are computed and dropped).
    tm = min(tm, pl.cdiv(M, 8) * 8)
    Mp = pl.cdiv(M, tm) * tm

    x2 = x.reshape(M, E).astype(jnp.bfloat16)
    if Mp != M:
        x2 = jnp.pad(x2, ((0, Mp - M), (0, 0)))
    w1b = w1.astype(jnp.bfloat16)
    w2b = w2.astype(jnp.bfloat16)
    b1_2 = b1.reshape(1, H).astype(jnp.float32)
    b2_2 = b2.reshape(1, E).astype(jnp.float32)

    grid = (Mp // tm, H // th)  # reduction (hidden) axis last

    # Per-step VMEM: double-buffered inputs/output + f32 accumulator scratch,
    # with headroom. Set explicitly so a v6e-derived tiling can't silently
    # spill / OOM against v7x's smaller scoped default.
    vmem_bytes = (2 * tm * E * 2                            # x tile (bf16)
                  + 2 * (E * th * 2 + th * 4 + th * E * 2)  # w1, b1, w2 tiles
                  + 2 * E * 4                               # b2
                  + 2 * tm * E * 4                          # out tile (f32)
                  + tm * E * 4)                             # accumulator scratch
    vmem_limit = min(max(2 * vmem_bytes, 32 * 1024 * 1024), 64 * 1024 * 1024)

    cost = pl.CostEstimate(
        flops=4 * Mp * E * H,                 # two matmuls, 2*M*E*H each
        transcendentals=0,
        bytes_accessed=(Mp * E * 2 + E * H * 2 + H * E * 2
                        + H * 4 + E * 4 + Mp * E * 4))

    out2 = pl.pallas_call(
        ffn_kernel,
        out_shape=jax.ShapeDtypeStruct((Mp, E), x.dtype),
        grid_spec=pltpu.PrefetchScalarGridSpec(
            num_scalar_prefetch=0,
            grid=grid,
            in_specs=[
                pl.BlockSpec((tm, E), lambda i, k: (i, 0)),   # x row tile
                pl.BlockSpec((E, th), lambda i, k: (0, k)),   # W1 column block
                pl.BlockSpec((1, th), lambda i, k: (0, k)),   # b1 chunk
                pl.BlockSpec((th, E), lambda i, k: (k, 0)),   # W2 row block
                pl.BlockSpec((1, E), lambda i, k: (0, 0)),    # b2 (tiny/constant)
            ],
            out_specs=pl.BlockSpec((tm, E), lambda i, k: (i, 0)),
            scratch_shapes=[pltpu.VMEM((tm, E), jnp.float32)],
        ),
        compiler_params=pltpu.CompilerParams(
            dimension_semantics=("parallel", "arbitrary"),
            vmem_limit_bytes=vmem_limit),
        cost_estimate=cost,
    )(x2, w1b, b1_2, w2b, b2_2)

    return out2[:M].reshape(B, T, E)


def init_params(key, embed_dim):
    """Deterministic PyTorch-Linear-style init: U(-1/sqrt(fan_in), 1/sqrt(fan_in))."""
    hidden = 4 * embed_dim
    k1, k2, k3, k4 = jax.random.split(key, 4)
    bound1 = 1.0 / jnp.sqrt(embed_dim)
    bound2 = 1.0 / jnp.sqrt(hidden)
    # stored as (in_dim, out_dim) so kernel computes x @ W + b
    w1 = jax.random.uniform(k1, (embed_dim, hidden), jnp.float32, -bound1, bound1)
    b1 = jax.random.uniform(k2, (hidden,), jnp.float32, -bound1, bound1)
    w2 = jax.random.uniform(k3, (hidden, embed_dim), jnp.float32, -bound2, bound2)
    b2 = jax.random.uniform(k4, (embed_dim,), jnp.float32, -bound2, bound2)
    return w1, b1, w2, b2


if __name__ == "__main__":
    key = jax.random.PRNGKey(0)
    # E=128 keeps the output lane-dense; T=9 makes M=18 (not a tile multiple)
    # to exercise the row-padding path. th=256 gives 2 hidden-streaming steps
    # to exercise the accumulator init/finalize path.
    B, T, E = 2, 9, 128
    kx, kp = jax.random.split(key)
    x = jax.random.normal(kx, (B, T, E), jnp.float32)
    w1, b1, w2, b2 = init_params(kp, E)

    out = feed_forward(x, w1, b1, w2, b2, th=256)
    out = jax.block_until_ready(out)

    # Reference: same bf16-operand / f32-accumulation arithmetic, eval-mode dropout.
    xb = x.reshape(-1, E).astype(jnp.bfloat16)
    h = jnp.maximum(
        jnp.dot(xb, w1.astype(jnp.bfloat16),
                preferred_element_type=jnp.float32) + b1, 0.0)
    ref = jnp.dot(h.astype(jnp.bfloat16), w2.astype(jnp.bfloat16),
                  preferred_element_type=jnp.float32) + b2
    ref = ref.reshape(B, T, E)
    assert jnp.allclose(out, ref, atol=1e-2, rtol=1e-2), "mismatch vs reference"

    print("KERNEL_OK")
</pallas_src>

<mosaic_0001>
module attributes {stable_mosaic.version = 11 : i64} {
  func.func @ffn_kernel(%arg0: i32, %arg1: i32, %arg2: memref<24x128xbf16, #tpu.memory_space<vmem>>, %arg3: memref<128x256xbf16, #tpu.memory_space<vmem>>, %arg4: memref<1x256xf32, #tpu.memory_space<vmem>>, %arg5: memref<256x128xbf16, #tpu.memory_space<vmem>>, %arg6: memref<1x128xf32, #tpu.memory_space<vmem>>, %arg7: memref<24x128xf32, #tpu.memory_space<vmem>>, %arg8: memref<24x128xf32, #tpu.memory_space<vmem>>) attributes {dimension_semantics = [#tpu.dimension_semantics<parallel>, #tpu.dimension_semantics<arbitrary>], iteration_bounds = array<i64: 1, 2>, scalar_prefetch = 0 : i64, scratch_operands = 1 : i64, tpu.core_type = #tpu.core_type<tc>, window_params = [{transform_indices = @transform_0, window_bounds = array<i64: 24, 128>}, {transform_indices = @transform_1, window_bounds = array<i64: 128, 256>}, {transform_indices = @transform_2, window_bounds = array<i64: 1, 256>}, {transform_indices = @transform_3, window_bounds = array<i64: 256, 128>}, {pipeline_mode = #tpu.pipeline_mode<synchronous>, transform_indices = @transform_4, window_bounds = array<i64: 1, 128>}, {transform_indices = @transform_5, window_bounds = array<i64: 24, 128>}]} {
    %c0_i32 = arith.constant 0 : i32
    %0 = arith.cmpi eq, %arg1, %c0_i32 : i32
    %1 = arith.extui %0 : i1 to i32
    %c0_i32_0 = arith.constant 0 : i32
    %2 = arith.cmpi ne, %1, %c0_i32_0 : i32
    scf.if %2 {
      %cst_15 = arith.constant 0.000000e+00 : f32
      %20 = vector.broadcast %cst_15 : f32 to vector<24x128xf32>
      %c0_16 = arith.constant 0 : index
      %c0_17 = arith.constant 0 : index
      %21 = vector.load %arg8[%c0_16, %c0_17] : memref<24x128xf32, #tpu.memory_space<vmem>>, vector<24x128xf32>
      tpu.vector_store %arg8[%c0_16, %c0_17], %20 {strides = array<i32>} : memref<24x128xf32, #tpu.memory_space<vmem>>, vector<24x128xf32>,
    } else {
    }
    %c0 = arith.constant 0 : index
    %c0_1 = arith.constant 0 : index
    %3 = vector.load %arg2[%c0, %c0_1] : memref<24x128xbf16, #tpu.memory_space<vmem>>, vector<24x128xbf16>
    %c0_2 = arith.constant 0 : index
    %c0_3 = arith.constant 0 : index
    %4 = vector.load %arg3[%c0_2, %c0_3] : memref<128x256xbf16, #tpu.memory_space<vmem>>, vector<128x256xbf16>
    %cst = arith.constant dense<0.000000e+00> : vector<24x256xf32>
    %5 = tpu.matmul %3, %4, %cst {dimension_numbers = #tpu.dot_dimension_numbers<[1], [0], [0], [1], [0, 0, 1, 1], [], []>} : vector<24x128xbf16>, vector<128x256xbf16>, vector<24x256xf32> -> vector<24x256xf32>
    %c0_4 = arith.constant 0 : index
    %c0_5 = arith.constant 0 : index
    %6 = vector.load %arg4[%c0_4, %c0_5] : memref<1x256xf32, #tpu.memory_space<vmem>>, vector<1x256xf32>
    %7 = vector.broadcast %6 : vector<1x256xf32> to vector<24x256xf32>
    %8 = arith.addf %5, %7 : vector<24x256xf32>
    %cst_6 = arith.constant 0.000000e+00 : f32
    %9 = vector.broadcast %cst_6 : f32 to vector<24x256xf32>
    %10 = arith.maximumf %8, %9 : vector<24x256xf32>
    %c0_7 = arith.constant 0 : index
    %c0_8 = arith.constant 0 : index
    %11 = vector.load %arg8[%c0_7, %c0_8] : memref<24x128xf32, #tpu.memory_space<vmem>>, vector<24x128xf32>
    %12 = arith.truncf %10 : vector<24x256xf32> to vector<24x256xbf16>
    %c0_9 = arith.constant 0 : index
    %c0_10 = arith.constant 0 : index
    %13 = vector.load %arg5[%c0_9, %c0_10] : memref<256x128xbf16, #tpu.memory_space<vmem>>, vector<256x128xbf16>
    %cst_11 = arith.constant dense<0.000000e+00> : vector<24x128xf32>
    %14 = tpu.matmul %12, %13, %cst_11 {dimension_numbers = #tpu.dot_dimension_numbers<[1], [0], [0], [1], [0, 0, 1, 1], [], []>} : vector<24x256xbf16>, vector<256x128xbf16>, vector<24x128xf32> -> vector<24x128xf32>
    %15 = arith.addf %11, %14 : vector<24x128xf32>
    %c0_12 = arith.constant 0 : index
    %c0_13 = arith.constant 0 : index
    %16 = vector.load %arg8[%c0_12, %c0_13] : memref<24x128xf32, #tpu.memory_space<vmem>>, vector<24x128xf32>
    tpu.vector_store %arg8[%c0_12, %c0_13], %15 {strides = array<i32>} : memref<24x128xf32, #tpu.memory_space<vmem>>, vector<24x128xf32>,
    %c1_i32 = arith.constant 1 : i32
    %17 = arith.cmpi eq, %arg1, %c1_i32 : i32
    %18 = arith.extui %17 : i1 to i32
    %c0_i32_14 = arith.constant 0 : i32
    %19 = arith.cmpi ne, %18, %c0_i32_14 : i32
    scf.if %19 {
      %c0_15 = arith.constant 0 : index
      %c0_16 = arith.constant 0 : index
      %20 = vector.load %arg8[%c0_15, %c0_16] : memref<24x128xf32, #tpu.memory_space<vmem>>, vector<24x128xf32>
      %c0_17 = arith.constant 0 : index
      %c0_18 = arith.constant 0 : index
      %21 = vector.load %arg6[%c0_17, %c0_18] : memref<1x128xf32, #tpu.memory_space<vmem>>, vector<1x128xf32>
      %22 = vector.broadcast %21 : vector<1x128xf32> to vector<24x128xf32>
      %23 = arith.addf %20, %22 : vector<24x128xf32>
      %c0_19 = arith.constant 0 : index
      %c0_20 = arith.constant 0 : index
      %24 = vector.load %arg7[%c0_19, %c0_20] : memref<24x128xf32, #tpu.memory_space<vmem>>, vector<24x128xf32>
      tpu.vector_store %arg7[%c0_19, %c0_20], %23 {strides = array<i32>} : memref<24x128xf32, #tpu.memory_space<vmem>>, vector<24x128xf32>,
    } else {
    }
    return
  }
  func.func @transform_0(%arg0: i32, %arg1: i32) -> (i32, i32) {
    %c0_i32 = arith.constant 0 : i32
    %c0_i32_0 = arith.constant 0 : i32
    return %arg0, %c0_i32 : i32, i32
  }
  func.func @transform_1(%arg0: i32, %arg1: i32) -> (i32, i32) {
    %c0_i32 = arith.constant 0 : i32
    %c0_i32_0 = arith.constant 0 : i32
    return %c0_i32, %arg1 : i32, i32
  }
  func.func @transform_2(%arg0: i32, %arg1: i32) -> (i32, i32) {
    %c0_i32 = arith.constant 0 : i32
    %c0_i32_0 = arith.constant 0 : i32
    return %c0_i32, %arg1 : i32, i32
  }
  func.func @transform_3(%arg0: i32, %arg1: i32) -> (i32, i32) {
    %c0_i32 = arith.constant 0 : i32
    %c0_i32_0 = arith.constant 0 : i32
    return %arg1, %c0_i32 : i32, i32
  }
  func.func @transform_4(%arg0: i32, %arg1: i32) -> (i32, i32) {
    %c0_i32 = arith.constant 0 : i32
    %c0_i32_0 = arith.constant 0 : i32
    %c0_i32_1 = arith.constant 0 : i32
    return %c0_i32, %c0_i32_0 : i32, i32
  }
  func.func @transform_5(%arg0: i32, %arg1: i32) -> (i32, i32) {
    %c0_i32 = arith.constant 0 : i32
    %c0_i32_0 = arith.constant 0 : i32
    return %arg0, %c0_i32 : i32, i32
  }
}

</mosaic_0001>

<llo_original>
// kernel: tpu_custom_call.1
$region0: #{tpu_custom_call.1}
  #allocation0 [shape = 'u32[]', space=smem, size = 0x4, offset = 0x4, fixed_abs, tag = 'smem constant byte address 0x4 - core index']
  #allocation1 [shape = 'u32[144,128]{1,0:T(1,128)}', space=vmem, size = 0x12000, scoped, tag = 'internal scratch']
  #allocation2 [shape = 'f32[24,128]{1,0:T(8,128)}', space=vmem, size = 0x3000, scoped, tag = 'scratch operand']
  %s0 = inlined_call_operand.hbm [shape: bf16[24,128], index: 0, kind: input, shape index: {}]
  %s1 = inlined_call_operand.hbm [shape: bf16[128,512], index: 1, kind: input, shape index: {}]
  %s2 = inlined_call_operand.vmem [shape: f32[1,512], index: 2, kind: input, shape index: {}]
  %s3 = inlined_call_operand.hbm [shape: bf16[512,128], index: 3, kind: input, shape index: {}]
  %s4 = inlined_call_operand.vmem [shape: f32[1,128], index: 4, kind: input, shape index: {}]
  %s5 = inlined_call_operand.hbm [shape: f32[24,128], index: 5, kind: output, shape index: {}]
  %s6 = sld [smem:[#allocation0]]
  $region73: #{tpu_custom_call.1} parent=0
    _
  %s8 = ssub.s32 1, %s6
  %s9 = scalar_select 0, %s8, %s6
  $region1: #{tpu_custom_call.1} parent=0
    #allocation3 [shape = 'u8[6144]{0}', space=vmem, size = 0x1800, scoped, tag = 'input window, operand 0, single buffered']
    #allocation4 [shape = 's32[2]{0}', space=sflag, size = 0x8, scoped, tag = 'scoped memory for tpu_custom_call.1']
    #allocation5 [shape = 's32[2]{0}', space=sflag, size = 0x8, scoped, tag = 'scoped memory for tpu_custom_call.1']
    #allocation6 [shape = 'u8[131072]{0}', space=vmem, size = 0x20000, scoped, tag = 'input window, operand 1']
    #allocation7 [shape = 's32[2]{0}', space=sflag, size = 0x8, scoped, tag = 'scoped memory for tpu_custom_call.1']
    #allocation8 [shape = 'u8[131072]{0}', space=vmem, size = 0x20000, scoped, tag = 'input window, operand 3']
    #allocation9 [shape = 'u8[12288]{0}', space=vmem, size = 0x3000, scoped, tag = 'output window, operand 0, single buffered']
    %10 = vsyncpa [#allocation4], 0
    %11 = vsyncpa [#allocation7], 0
    %s12 = scalar_lea.sflag [#allocation7], 1
    %13 = vsyncpa %s12, 0
    %14 = vsyncpa [#allocation5], 0
    loop: start=0, step=1, limit=4
    $region2: #{tpu_custom_call.1} parent=1 // loop_pre_header
      _
    $region3: #{tpu_custom_call.1} parent=1 // loop_header
      %s16 = sphi 0, %s20
      %p17 = scmp.ge.s32.totalorder %s16, 4
      %s23 = sphi 0, %s35
      %s24 = sphi 0, %s31
      %s25 = sphi 0, %s23
      %s26 = sphi 0, %s24
      %s27 = sphi 0, %s25
      %s28 = sphi 0, %s26
      %s38 = sphi 0, %s40
      %s41 = sphi 0, %s38
      %s42 = sphi 0, %s41
      %s58 = sphi 0, %s42
      %s64 = sphi 0, %s66
      %s67 = sphi 0, %s64
      %s68 = sphi 0, %s67
      %s84 = sphi 0, %s68
      %s90 = sphi 0, %s92
      %s93 = sphi 0, %s90
      %s94 = sphi 0, %s93
      %s110 = sphi 0, %s94
      %s116 = sphi 0, %s118
      %s119 = sphi 0, %s116
      %s120 = sphi 0, %s119
      %s136 = sphi 0, %s120
      %s140 = sphi 0, %s140
      %s142 = sphi 0, %s140
      %s143 = sphi 0, %s142
      %s157 = sphi 0, %s143
      %s163 = sphi 0, %s165
      %s166 = sphi 0, %s163
      %s167 = sphi 0, %s166
      %s183 = sphi 0, %s167
    $region4: #{tpu_custom_call.1} parent=1 // loop_header_branch
      %19 = sbr.rel (%p17) target = $region8
    $region5: #{tpu_custom_call.1} parent=1 // loop_body
      %s21 = ssub.s32 %s16, 1
      %s22 = ssub.s32 %s16, 2
      %s29 = sadd.s32 1, %s24
      %p30 = scmp.ge.s32.totalorder %s29, 2
      %s31 = scalar_select %p30, 0, %s29
      %s32 = sadd.s32 1, %s23
      %s33 = scalar_select %p30, %s32, %s23
      %p34 = scmp.ge.s32.totalorder %s33, 1
      %s35 = scalar_select %p34, 0, %s33
      %s36 = ssub.s32 %s23, %s35
      %p37 = scmp.eq.s32.totalorder %s36, 0
      %s39 = sadd.s32 %s38, 1
      %s40 = scalar_select %p37, %s38, %s39
      %p43 = pneg %p37
      %p44 = scmp.eq.s32.totalorder %s16, 1
      %p45 = por %p43, %p44
      %p46 = scmp.ne.s32.totalorder %s38, %s41
      %p47 = scmp.eq.s32.totalorder %s16, 0
      %p48 = por %p46, %p47
      %p49 = scmp.ne.s32.totalorder %s38, %s41
      %p50 = scmp.eq.s32.totalorder %s21, 1
      %p51 = por %p49, %p50
      %p52 = scmp.ne.s32.totalorder %s41, %s42
      %p53 = scmp.eq.s32.totalorder %s21, 0
      %p54 = por %p52, %p53
      %p55 = scmp.ne.s32.totalorder %s41, %s42
      %p56 = scmp.eq.s32.totalorder %s22, 1
      %p57 = por %p55, %p56
      %p59 = scmp.ne.s32.totalorder %s42, %s58
      %p60 = scmp.eq.s32.totalorder %s22, 0
      %p61 = por %p59, %p60
      %s62 = ssub.s32 %s24, %s31
      %p63 = scmp.eq.s32.totalorder %s62, 0
      %s65 = sadd.s32 %s64, 1
      %s66 = scalar_select %p63, %s64, %s65
      %p69 = pneg %p63
      %p70 = scmp.eq.s32.totalorder %s16, 1
      %p71 = por %p69, %p70
      %p72 = scmp.ne.s32.totalorder %s64, %s67
      %p73 = scmp.eq.s32.totalorder %s16, 0
      %p74 = por %p72, %p73
      %p75 = scmp.ne.s32.totalorder %s64, %s67
      %p76 = scmp.eq.s32.totalorder %s21, 1
      %p77 = por %p75, %p76
      %p78 = scmp.ne.s32.totalorder %s67, %s68
      %p79 = scmp.eq.s32.totalorder %s21, 0
      %p80 = por %p78, %p79
      %p81 = scmp.ne.s32.totalorder %s67, %s68
      %p82 = scmp.eq.s32.totalorder %s22, 1
      %p83 = por %p81, %p82
      %p85 = scmp.ne.s32.totalorder %s68, %s84
      %p86 = scmp.eq.s32.totalorder %s22, 0
      %p87 = por %p85, %p86
      %s88 = ssub.s32 %s24, %s31
      %p89 = scmp.eq.s32.totalorder %s88, 0
      %s91 = sadd.s32 %s90, 1
      %s92 = scalar_select %p89, %s90, %s91
      %p95 = pneg %p89
      %p96 = scmp.eq.s32.totalorder %s16, 1
      %p97 = por %p95, %p96
      %p98 = scmp.ne.s32.totalorder %s90, %s93
      %p99 = scmp.eq.s32.totalorder %s16, 0
      %p100 = por %p98, %p99
      %p101 = scmp.ne.s32.totalorder %s90, %s93
      %p102 = scmp.eq.s32.totalorder %s21, 1
      %p103 = por %p101, %p102
      %p104 = scmp.ne.s32.totalorder %s93, %s94
      %p105 = scmp.eq.s32.totalorder %s21, 0
      %p106 = por %p104, %p105
      %p107 = scmp.ne.s32.totalorder %s93, %s94
      %p108 = scmp.eq.s32.totalorder %s22, 1
      %p109 = por %p107, %p108
      %p111 = scmp.ne.s32.totalorder %s94, %s110
      %p112 = scmp.eq.s32.totalorder %s22, 0
      %p113 = por %p111, %p112
      %s114 = ssub.s32 %s24, %s31
      %p115 = scmp.eq.s32.totalorder %s114, 0
      %s117 = sadd.s32 %s116, 1
      %s118 = scalar_select %p115, %s116, %s117
      %p121 = pneg %p115
      %p122 = scmp.eq.s32.totalorder %s16, 1
      %p123 = por %p121, %p122
      %p124 = scmp.ne.s32.totalorder %s116, %s119
      %p125 = scmp.eq.s32.totalorder %s16, 0
      %p126 = por %p124, %p125
      %p127 = scmp.ne.s32.totalorder %s116, %s119
      %p128 = scmp.eq.s32.totalorder %s21, 1
      %p129 = por %p127, %p128
      %p130 = scmp.ne.s32.totalorder %s119, %s120
      %p131 = scmp.eq.s32.totalorder %s21, 0
      %p132 = por %p130, %p131
      %p133 = scmp.ne.s32.totalorder %s119, %s120
      %p134 = scmp.eq.s32.totalorder %s22, 1
      %p135 = por %p133, %p134
      %p137 = scmp.ne.s32.totalorder %s120, %s136
      %p138 = scmp.eq.s32.totalorder %s22, 0
      %p139 = por %p137, %p138
      %s141 = sadd.s32 %s140, 1
      %p144 = scmp.eq.s32.totalorder %s16, 1
      %p145 = scmp.ne.s32.totalorder %s140, %s142
      %p146 = scmp.eq.s32.totalorder %s16, 0
      %p147 = por %p145, %p146
      %p148 = scmp.ne.s32.totalorder %s140, %s142
      %p149 = scmp.eq.s32.totalorder %s21, 1
      %p150 = por %p148, %p149
      %p151 = scmp.ne.s32.totalorder %s142, %s143
      %p152 = scmp.eq.s32.totalorder %s21, 0
      %p153 = por %p151, %p152
      %p154 = scmp.ne.s32.totalorder %s142, %s143
      %p155 = scmp.eq.s32.totalorder %s22, 1
      %p156 = por %p154, %p155
      %p158 = scmp.ne.s32.totalorder %s143, %s157
      %p159 = scmp.eq.s32.totalorder %s22, 0
      %p160 = por %p158, %p159
      %s161 = ssub.s32 %s23, %s35
      %p162 = scmp.eq.s32.totalorder %s161, 0
      %s164 = sadd.s32 %s163, 1
      %s165 = scalar_select %p162, %s163, %s164
      %p168 = pneg %p162
      %p169 = scmp.eq.s32.totalorder %s16, 1
      %p170 = por %p168, %p169
      %p171 = scmp.ne.s32.totalorder %s163, %s166
      %p172 = scmp.eq.s32.totalorder %s16, 0
      %p173 = por %p171, %p172
      %p174 = scmp.ne.s32.totalorder %s163, %s166
      %p175 = scmp.eq.s32.totalorder %s21, 1
      %p176 = por %p174, %p175
      %p177 = scmp.ne.s32.totalorder %s166, %s167
      %p178 = scmp.eq.s32.totalorder %s21, 0
      %p179 = por %p177, %p178
      %p180 = scmp.ne.s32.totalorder %s166, %s167
      %p181 = scmp.eq.s32.totalorder %s22, 1
      %p182 = por %p180, %p181
      %p184 = scmp.ne.s32.totalorder %s167, %s183
      %p185 = scmp.eq.s32.totalorder %s22, 0
      %p186 = por %p184, %p185
      %p187 = scmp.le.s32.totalorder 1, %s16
      %p188 = scmp.lt.s32.totalorder %s16, 3
      %p189 = pnand %p187, %p188
      %p190 = pneg %p189
      // Predicated region
      $region9: #{tpu_custom_call.1} parent=5 // pred_check
        _
      $region10: #{tpu_custom_call.1} parent=5 // pred_check_branch
        %192 = sbr.rel (%p189) target = $region12
      $region11: #{tpu_custom_call.1} parent=5 // pred_region
        %s193 = ssub.s32 %s16, 1
        // Predicated region
        $region13: #{tpu_custom_call.1} parent=11 // pred_check
          %p194 = pneg %p54
        $region14: #{tpu_custom_call.1} parent=11 // pred_check_branch
          %196 = sbr.rel (%p194) target = $region16
        $region15: #{tpu_custom_call.1} parent=11 // pred_region
          %s197 = smul.u32 3, %s25
          %s199 = ssub.s32 192, 192
          %200 = vsyncadd [#allocation4], %s199
          %s201 = smul.addr %s197, 64
          %s202 = scalar_lea.hbm %s0, %s201
          %s203 = sshll.u32 [#allocation3], 4
          %s204 = int_to_ptr.vmem [resolvable:$true] %s203
          %209 = dma.hbm_to_vmem [thread:$0]  %s202, 192, %s204, [#allocation4], 64, 64, 4
        $region16: #{tpu_custom_call.1} parent=11 // pred_fallthru
          _
        // Predicated region
        $region17: #{tpu_custom_call.1} parent=11 // pred_check
          %p210 = pneg %p153
        $region18: #{tpu_custom_call.1} parent=11 // pred_check_branch
          %212 = sbr.rel (%p210) target = $region20
        $region19: #{tpu_custom_call.1} parent=11 // pred_region
          _
        $region20: #{tpu_custom_call.1} parent=11 // pred_fallthru
          _
      $region12: #{tpu_custom_call.1} parent=5 // pred_fallthru
        _
      %p213 = scmp.lt.s32.totalorder %s16, 2
      // Predicated region
      $region21: #{tpu_custom_call.1} parent=5 // pred_check
        %p214 = pneg %p213
      $region22: #{tpu_custom_call.1} parent=5 // pred_check_branch
        %216 = sbr.rel (%p214) target = $region24
      $region23: #{tpu_custom_call.1} parent=5 // pred_region
        // Predicated region
        $region25: #{tpu_custom_call.1} parent=23 // pred_check
          %p217 = pneg %p74
        $region26: #{tpu_custom_call.1} parent=23 // pred_check_branch
          %219 = sbr.rel (%p217) target = $region28
        $region27: #{tpu_custom_call.1} parent=23 // pred_region
          %s220 = sand.u32 %s16, 1
          %s221 = scalar_lea.sflag [#allocation7], %s220
          %s222 = sand.u32 %s64, 1
          %s223 = smul.addr %s222, 128
          %s224 = scalar_lea.vmem [#allocation6], %s223
          %s225 = smul.u32 2, %s24
          %s227 = ssub.s32 2048, 2048
          %228 = vsyncadd %s221, %s227
          %s229 = smul.addr %s225, 64
          %s230 = scalar_lea.hbm %s1, %s229
          %s231 = sshll.u32 %s224, 4
          %s232 = int_to_ptr.vmem [resolvable:$true] %s231
          %237 = dma.hbm_to_vmem [thread:$0]  %s230, 2048, %s232, %s221, 256, 128, 8
        $region28: #{tpu_custom_call.1} parent=23 // pred_fallthru
          _
        // Predicated region
        $region29: #{tpu_custom_call.1} parent=23 // pred_check
          %p238 = pneg %p100
        $region30: #{tpu_custom_call.1} parent=23 // pred_check_branch
          %240 = sbr.rel (%p238) target = $region32
        $region31: #{tpu_custom_call.1} parent=23 // pred_region
          %s241 = smul.u32 2, %s24
          %p242 = scmp.lt.s32.totalorder %s241, 3
          %s243 = scalar_select %p242, %s241, 3
          %s244 = scalar_lea.vmem %s2, %s243
          %s245 = smul.u32 2, %s24
        $region32: #{tpu_custom_call.1} parent=23 // pred_fallthru
          _
        // Predicated region
        $region33: #{tpu_custom_call.1} parent=23 // pred_check
          %p246 = pneg %p126
        $region34: #{tpu_custom_call.1} parent=23 // pred_check_branch
          %248 = sbr.rel (%p246) target = $region36
        $region35: #{tpu_custom_call.1} parent=23 // pred_region
          %s249 = sand.u32 %s16, 1
          %s250 = scalar_lea.sflag [#allocation7], %s249
          %s251 = sand.u32 %s116, 1
          %s252 = smul.addr %s251, 128
          %s253 = scalar_lea.vmem [#allocation8], %s252
          %s254 = smul.u32 32, %s24
          %s256 = ssub.s32 2048, 2048
          %257 = vsyncadd %s250, %s256
          %s258 = smul.addr %s254, 64
          %s259 = scalar_lea.hbm %s3, %s258
          %s260 = sshll.u32 %s253, 4
          %s261 = int_to_ptr.vmem [resolvable:$true] %s260
          %266 = dma.hbm_to_vmem [thread:$0]  %s259, 2048, %s261, %s250, 64, 64, 4
        $region36: #{tpu_custom_call.1} parent=23 // pred_fallthru
          _
      $region24: #{tpu_custom_call.1} parent=5 // pred_fallthru
        _
      %p267 = scmp.le.s32.totalorder 1, %s16
      %p268 = scmp.lt.s32.totalorder %s16, 3
      %p269 = pnand %p267, %p268
      %p270 = pneg %p269
      // Predicated region
      $region37: #{tpu_custom_call.1} parent=5 // pred_check
        _
      $region38: #{tpu_custom_call.1} parent=5 // pred_check_branch
        %272 = sbr.rel (%p269) target = $region40
      $region39: #{tpu_custom_call.1} parent=5 // pred_region
        %s273 = ssub.s32 %s16, 1
        // Predicated region
        $region41: #{tpu_custom_call.1} parent=39 // pred_check
          %p274 = pneg %p54
        $region42: #{tpu_custom_call.1} parent=39 // pred_check_branch
          %276 = sbr.rel (%p274) target = $region44
        $region43: #{tpu_custom_call.1} parent=39 // pred_region
          %277 = dma.done [#allocation4], 192
        $region44: #{tpu_custom_call.1} parent=39 // pred_fallthru
          _
        %s278 = sand.u32 %s21, 1
        %s279 = scalar_lea.sflag [#allocation7], %s278
        %s280 = sand.u32 %s67, 1
        %s281 = smul.addr %s280, 128
        %s282 = scalar_lea.vmem [#allocation6], %s281
        // Predicated region
        $region45: #{tpu_custom_call.1} parent=39 // pred_check
          %p283 = pneg %p80
        $region46: #{tpu_custom_call.1} parent=39 // pred_check_branch
          %285 = sbr.rel (%p283) target = $region48
        $region47: #{tpu_custom_call.1} parent=39 // pred_region
          %286 = dma.done %s279, 2048
        $region48: #{tpu_custom_call.1} parent=39 // pred_fallthru
          _
        %s287 = sand.u32 %s21, 1
        %s288 = scalar_lea.sflag [#allocation7], %s287
        %s289 = sand.u32 %s119, 1
        %s290 = smul.addr %s289, 128
        %s291 = scalar_lea.vmem [#allocation8], %s290
        // Predicated region
        $region49: #{tpu_custom_call.1} parent=39 // pred_check
          %p292 = pneg %p132
        $region50: #{tpu_custom_call.1} parent=39 // pred_check_branch
          %294 = sbr.rel (%p292) target = $region52
        $region51: #{tpu_custom_call.1} parent=39 // pred_region
          %295 = dma.done %s288, 2048
        $region52: #{tpu_custom_call.1} parent=39 // pred_fallthru
          _
        %p296 = pneg %p54
        %p297 = pneg %p51
        %s298 = sand.u32 %s21, 1
        %s299 = scalar_lea.sflag [#allocation7], %s298
        %s300 = sand.u32 %s67, 1
        %s301 = smul.addr %s300, 128
        %s302 = scalar_lea.vmem [#allocation6], %s301
        %p303 = pneg %p80
        %p304 = pneg %p77
        %s305 = smul.u32 2, %s26
        %p306 = scmp.lt.s32.totalorder %s305, 3
        %s307 = scalar_select %p306, %s305, 3
        %s308 = scalar_lea.vmem %s2, %s307
        %p309 = pneg %p106
        %p310 = pneg %p103
        %s311 = sand.u32 %s21, 1
        %s312 = scalar_lea.sflag [#allocation7], %s311
        %s313 = sand.u32 %s119, 1
        %s314 = smul.addr %s313, 128
        %s315 = scalar_lea.vmem [#allocation8], %s314
        %p316 = pneg %p132
        %p317 = pneg %p129
        %p318 = pneg %p153
        %p319 = pneg %p150
        %p320 = pneg %p179
        %p321 = pneg %p176
        %s322 = smul.u32 3, %s25
        %s323 = smul.u32 2, %s26
        %s324 = smul.u32 2, %s26
        %p325 = scmp.lt.s32.totalorder %s324, 3
        %s326 = scalar_select %p325, %s324, 3
        %s327 = scalar_lea.vmem %s2, %s326
        %s328 = smul.u32 2, %s26
        %s329 = smul.u32 32, %s26
        %s330 = smul.u32 3, %s25
        %p332 = scmp.eq.s32.totalorder %s26, 0
        // Predicated region
        $region53: #{tpu_custom_call.1} parent=39 // pred_check
          %p333 = pneg %p332
        $region54: #{tpu_custom_call.1} parent=39 // pred_check_branch
          %335 = sbr.rel (%p333) target = $region56
        $region55: #{tpu_custom_call.1} parent=39 // pred_region
          %336 = vst [vmem:[#allocation2] sm:$0xff] 0.0
          %337 = vst [vmem:[#allocation2 + $0x8] sm:$0xff] 0.0
          %338 = vst [vmem:[#allocation2 + $0x10] sm:$0xff] 0.0
        $region56: #{tpu_custom_call.1} parent=39 // pred_fallthru
          _
        %v339 = vld [vmem:[#allocation3] sm:$0xf]
        %v340 = vld [vmem:[#allocation3 + $0x4] sm:$0xf]
        %v341 = vld [vmem:[#allocation3 + $0x8] sm:$0xf]
        %v342 = vld [vmem:[%s282] sm:$0xff]
        %v343 = vld [vmem:[%s282 + $0x8] sm:$0xff]
        %v344 = vld [vmem:[%s282 + $0x10] sm:$0xff]
        %v345 = vld [vmem:[%s282 + $0x18] sm:$0xff]
        %v346 = vld [vmem:[%s282 + $0x20] sm:$0xff]
        %v347 = vld [vmem:[%s282 + $0x28] sm:$0xff]
        %v348 = vld [vmem:[%s282 + $0x30] sm:$0xff]
        %v349 = vld [vmem:[%s282 + $0x38] sm:$0xff]
        %v350 = vld [vmem:[%s282 + $0x40] sm:$0xff]
        %v351 = vld [vmem:[%s282 + $0x48] sm:$0xff]
        %v352 = vld [vmem:[%s282 + $0x50] sm:$0xff]
        %v353 = vld [vmem:[%s282 + $0x58] sm:$0xff]
        %v354 = vld [vmem:[%s282 + $0x60] sm:$0xff]
        %v355 = vld [vmem:[%s282 + $0x68] sm:$0xff]
        %v356 = vld [vmem:[%s282 + $0x70] sm:$0xff]
        %v357 = vld [vmem:[%s282 + $0x78] sm:$0xff]
        %v358 = vld [vmem:[%s327] sm:$0x3]
        %v360 = vlaneseq
        %v361 = vshrl.u32 %v360, 7
        %v362 = vsub.s32 0, %v361
        %v363 = vrot.slane %v358, %v362
        %v364 = vlaneseq
        %v365 = vshrl.u32 %v364, 7
        %v366 = vsub.s32 1, %v365
        %v367 = vrot.slane %v358, %v366
        %v373 = vunpack.c.l.b16 %v339
        %v374 = vunpack.c.l.b16 %v340
        %v375 = vunpack.c.l.b16 %v341
        %v376 = vpack.c.b16 %v374, %v373
        %v377 = vpack.c.b16 %v375, %v375
        %v396 = vunpack.c.l.b16 %v342
        %v397 = vunpack.c.h.b16 %v342
        %v398 = vunpack.c.l.b16 %v343
        %v399 = vunpack.c.h.b16 %v343
        %v400 = vunpack.c.l.b16 %v344
        %v401 = vunpack.c.h.b16 %v344
        %v402 = vunpack.c.l.b16 %v345
        %v403 = vunpack.c.h.b16 %v345
        %v404 = vunpack.c.l.b16 %v346
        %v405 = vunpack.c.h.b16 %v346
        %v406 = vunpack.c.l.b16 %v347
        %v407 = vunpack.c.h.b16 %v347
        %v408 = vunpack.c.l.b16 %v348
        %v409 = vunpack.c.h.b16 %v348
        %v410 = vunpack.c.l.b16 %v349
        %v411 = vunpack.c.h.b16 %v349
        %v412 = vunpack.c.l.b16 %v350
        %v413 = vunpack.c.h.b16 %v350
        %v414 = vunpack.c.l.b16 %v351
        %v415 = vunpack.c.h.b16 %v351
        %v416 = vunpack.c.l.b16 %v352
        %v417 = vunpack.c.h.b16 %v352
        %v418 = vunpack.c.l.b16 %v353
        %v419 = vunpack.c.h.b16 %v353
        %v420 = vunpack.c.l.b16 %v354
        %v421 = vunpack.c.h.b16 %v354
        %v422 = vunpack.c.l.b16 %v355
        %v423 = vunpack.c.h.b16 %v355
        %v424 = vunpack.c.l.b16 %v356
        %v425 = vunpack.c.h.b16 %v356
        %v426 = vunpack.c.l.b16 %v357
        %v427 = vunpack.c.h.b16 %v357
        %v428 = vpack.c.b16 %v398, %v396
        %v429 = vpack.c.b16 %v399, %v397
        %v430 = vpack.c.b16 %v402, %v400
        %v431 = vpack.c.b16 %v403, %v401
        %v432 = vpack.c.b16 %v406, %v404
        %v433 = vpack.c.b16 %v407, %v405
        %v434 = vpack.c.b16 %v410, %v408
        %v435 = vpack.c.b16 %v411, %v409
        %v436 = vpack.c.b16 %v414, %v412
        %v437 = vpack.c.b16 %v415, %v413
        %v438 = vpack.c.b16 %v418, %v416
        %v439 = vpack.c.b16 %v419, %v417
        %v440 = vpack.c.b16 %v422, %v420
        %v441 = vpack.c.b16 %v423, %v421
        %v442 = vpack.c.b16 %v426, %v424
        %v443 = vpack.c.b16 %v427, %v425
        %460 = vmatprep.subr.bf16.mxu0 %v429
        %461 = vmatpush1.bf16.msra.mxu0 %v428
        %462 = vmatprep.subr.bf16.mxu0 %v431
        %463 = vmatpush1.bf16.msra.mxu0 %v430
        %464 = vmatprep.subr.bf16.mxu0 %v433
        %465 = vmatpush1.bf16.msra.mxu0 %v432
        %466 = vmatprep.subr.bf16.mxu0 %v435
        %467 = vmatpush1.bf16.msra.mxu0 %v434
        %468 = vmatprep.subr.bf16.mxu0 %v437
        %469 = vmatpush1.bf16.msra.mxu0 %v436
        %470 = vmatprep.subr.bf16.mxu0 %v439
        %471 = vmatpush1.bf16.msra.mxu0 %v438
        %472 = vmatprep.subr.bf16.mxu0 %v441
        %473 = vmatpush1.bf16.msra.mxu0 %v440
        %474 = vmatprep.subr.bf16.mxu0 %v443
        %475 = vmatpush1.bf16.msra.mxu0 %v442
        %476 = vmatprep.subr.bf16.mxu0 0
        %477 = vmatpush1.bf16.msra.mxu0 0
        %478 = vmatprep.subr.bf16.mxu0 0
        %479 = vmatpush1.bf16.msra.mxu0 0
        %480 = vmatprep.subr.bf16.mxu0 0
        %481 = vmatpush1.bf16.msra.mxu0 0
        %482 = vmatprep.subr.bf16.mxu0 0
        %483 = vmatpush1.bf16.msra.mxu0 0
        %484 = vmatprep.subr.bf16.mxu0 0
        %485 = vmatpush1.bf16.msra.mxu0 0
        %486 = vmatprep.subr.bf16.mxu0 0
        %487 = vmatpush1.bf16.msra.mxu0 0
        %488 = vmatprep.subr.bf16.mxu0 0
        %489 = vmatpush1.bf16.msra.mxu0 0
        %490 = vmatprep.subr.bf16.mxu0 0
        %491 = vmatpush1.bf16.msra.mxu0 0
        %492 = vmatprep.mubr.bf16.mxu0 0
        %493 = vmatmul.mubr.bf16.gmra.mrb[0].mxu0 %v376
        %v494 = vpop.f32.mrb[0].mxu0
        %v495 = vadd.f32 %v363, %v494
        %v496 = vpop.f32.mrb[0].mxu0
        %v497 = vadd.f32 %v367, %v496
        %v498 = vpop.f32.mrb[0].mxu0
        %v499 = vadd.f32 %v363, %v498
        %v500 = vpop.f32.mrb[0].mxu0
        %v501 = vadd.f32 %v367, %v500
        %502 = vmatprep.mubr.bf16.mxu0 0
        %503 = vmatmul.mubr.bf16.gmra.mrb[0].mxu0 %v377
        %v504 = vpop.f32.mrb[0].mxu0
        %v505 = vadd.f32 %v363, %v504
        %v506 = vpop.f32.mrb[0].mxu0
        %v507 = vadd.f32 %v367, %v506
        %v508 = vpop.f32.mrb[0].mxu0
        %v509 = vpop.f32.mrb[0].mxu0
        %510 = vdwg.mxu0
        %v511 = vmax.f32 %v495, 0.0
        %v512 = vmax.f32 %v497, 0.0
        %v513 = vmax.f32 %v499, 0.0
        %v514 = vmax.f32 %v501, 0.0
        %v515 = vmax.f32 %v505, 0.0
        %v516 = vmax.f32 %v507, 0.0
        %v517 = vld [vmem:[#allocation2] sm:$0xff]
        %v518 = vld [vmem:[#allocation2 + $0x8] sm:$0xff]
        %v519 = vld [vmem:[#allocation2 + $0x10] sm:$0xff]
        %v520 = vpack.c.bf16 %v513, %v511
        %v521 = vpack.c.bf16 %v514, %v512
        %v522 = vpack.c.bf16 %v515, %v515
        %v523 = vpack.c.bf16 %v516, %v516
        %v524 = vld [vmem:[%s291] sm:$0xf]
        %v525 = vld [vmem:[%s291 + $0x4] sm:$0xf]
        %v526 = vld [vmem:[%s291 + $0x8] sm:$0xf]
        %v527 = vld [vmem:[%s291 + $0xc] sm:$0xf]
        %v528 = vld [vmem:[%s291 + $0x10] sm:$0xf]
        %v529 = vld [vmem:[%s291 + $0x14] sm:$0xf]
        %v530 = vld [vmem:[%s291 + $0x18] sm:$0xf]
        %v531 = vld [vmem:[%s291 + $0x1c] sm:$0xf]
        %v532 = vld [vmem:[%s291 + $0x20] sm:$0xf]
        %v533 = vld [vmem:[%s291 + $0x24] sm:$0xf]
        %v534 = vld [vmem:[%s291 + $0x28] sm:$0xf]
        %v535 = vld [vmem:[%s291 + $0x2c] sm:$0xf]
        %v536 = vld [vmem:[%s291 + $0x30] sm:$0xf]
        %v537 = vld [vmem:[%s291 + $0x34] sm:$0xf]
        %v538 = vld [vmem:[%s291 + $0x38] sm:$0xf]
        %v539 = vld [vmem:[%s291 + $0x3c] sm:$0xf]
        %v540 = vld [vmem:[%s291 + $0x40] sm:$0xf]
        %v541 = vld [vmem:[%s291 + $0x44] sm:$0xf]
        %v542 = vld [vmem:[%s291 + $0x48] sm:$0xf]
        %v543 = vld [vmem:[%s291 + $0x4c] sm:$0xf]
        %v544 = vld [vmem:[%s291 + $0x50] sm:$0xf]
        %v545 = vld [vmem:[%s291 + $0x54] sm:$0xf]
        %v546 = vld [vmem:[%s291 + $0x58] sm:$0xf]
        %v547 = vld [vmem:[%s291 + $0x5c] sm:$0xf]
        %v548 = vld [vmem:[%s291 + $0x60] sm:$0xf]
        %v549 = vld [vmem:[%s291 + $0x64] sm:$0xf]
        %v550 = vld [vmem:[%s291 + $0x68] sm:$0xf]
        %v551 = vld [vmem:[%s291 + $0x6c] sm:$0xf]
        %v552 = vld [vmem:[%s291 + $0x70] sm:$0xf]
        %v553 = vld [vmem:[%s291 + $0x74] sm:$0xf]
        %v554 = vld [vmem:[%s291 + $0x78] sm:$0xf]
        %v555 = vld [vmem:[%s291 + $0x7c] sm:$0xf]
        %v588 = vunpack.c.l.b16 %v524
        %v589 = vunpack.c.l.b16 %v525
        %v590 = vunpack.c.l.b16 %v526
        %v591 = vunpack.c.l.b16 %v527
        %v592 = vunpack.c.l.b16 %v528
        %v593 = vunpack.c.l.b16 %v529
        %v594 = vunpack.c.l.b16 %v530
        %v595 = vunpack.c.l.b16 %v531
        %v596 = vunpack.c.l.b16 %v532
        %v597 = vunpack.c.l.b16 %v533
        %v598 = vunpack.c.l.b16 %v534
        %v599 = vunpack.c.l.b16 %v535
        %v600 = vunpack.c.l.b16 %v536
        %v601 = vunpack.c.l.b16 %v537
        %v602 = vunpack.c.l.b16 %v538
        %v603 = vunpack.c.l.b16 %v539
        %v604 = vunpack.c.l.b16 %v540
        %v605 = vunpack.c.l.b16 %v541
        %v606 = vunpack.c.l.b16 %v542
        %v607 = vunpack.c.l.b16 %v543
        %v608 = vunpack.c.l.b16 %v544
        %v609 = vunpack.c.l.b16 %v545
        %v610 = vunpack.c.l.b16 %v546
        %v611 = vunpack.c.l.b16 %v547
        %v612 = vunpack.c.l.b16 %v548
        %v613 = vunpack.c.l.b16 %v549
        %v614 = vunpack.c.l.b16 %v550
        %v615 = vunpack.c.l.b16 %v551
        %v616 = vunpack.c.l.b16 %v552
        %v617 = vunpack.c.l.b16 %v553
        %v618 = vunpack.c.l.b16 %v554
        %v619 = vunpack.c.l.b16 %v555
        %v620 = vpack.c.b16 %v589, %v588
        %v621 = vpack.c.b16 %v591, %v590
        %v622 = vpack.c.b16 %v593, %v592
        %v623 = vpack.c.b16 %v595, %v594
        %v624 = vpack.c.b16 %v597, %v596
        %v625 = vpack.c.b16 %v599, %v598
        %v626 = vpack.c.b16 %v601, %v600
        %v627 = vpack.c.b16 %v603, %v602
        %v628 = vpack.c.b16 %v605, %v604
        %v629 = vpack.c.b16 %v607, %v606
        %v630 = vpack.c.b16 %v609, %v608
        %v631 = vpack.c.b16 %v611, %v610
        %v632 = vpack.c.b16 %v613, %v612
        %v633 = vpack.c.b16 %v615, %v614
        %v634 = vpack.c.b16 %v617, %v616
        %v635 = vpack.c.b16 %v619, %v618
        %652 = vmatprep.subr.bf16.mxu0 0
        %653 = vmatpush1.bf16.msra.mxu0 %v620
        %654 = vmatprep.subr.bf16.mxu0 0
        %655 = vmatpush1.bf16.msra.mxu0 %v621
        %656 = vmatprep.subr.bf16.mxu0 0
        %657 = vmatpush1.bf16.msra.mxu0 %v622
        %658 = vmatprep.subr.bf16.mxu0 0
        %659 = vmatpush1.bf16.msra.mxu0 %v623
        %660 = vmatprep.subr.bf16.mxu0 0
        %661 = vmatpush1.bf16.msra.mxu0 %v624
        %662 = vmatprep.subr.bf16.mxu0 0
        %663 = vmatpush1.bf16.msra.mxu0 %v625
        %664 = vmatprep.subr.bf16.mxu0 0
        %665 = vmatpush1.bf16.msra.mxu0 %v626
        %666 = vmatprep.subr.bf16.mxu0 0
        %667 = vmatpush1.bf16.msra.mxu0 %v627
        %668 = vmatprep.subr.bf16.mxu0 0
        %669 = vmatpush1.bf16.msra.mxu0 %v628
        %670 = vmatprep.subr.bf16.mxu0 0
        %671 = vmatpush1.bf16.msra.mxu0 %v629
        %672 = vmatprep.subr.bf16.mxu0 0
        %673 = vmatpush1.bf16.msra.mxu0 %v630
        %674 = vmatprep.subr.bf16.mxu0 0
        %675 = vmatpush1.bf16.msra.mxu0 %v631
        %676 = vmatprep.subr.bf16.mxu0 0
        %677 = vmatpush1.bf16.msra.mxu0 %v632
        %678 = vmatprep.subr.bf16.mxu0 0
        %679 = vmatpush1.bf16.msra.mxu0 %v633
        %680 = vmatprep.subr.bf16.mxu0 0
        %681 = vmatpush1.bf16.msra.mxu0 %v634
        %682 = vmatprep.subr.bf16.mxu0 0
        %683 = vmatpush1.bf16.msra.mxu0 %v635
        %684 = vmatprep.mubr.bf16.mxu0 %v521
        %685 = vmatmul.mubr.bf16.gmra.mrb[0].mxu0 %v520
        %v686 = vpop.f32.mrb[0].mxu0
        %v687 = vadd.f32 0.0, %v686
        %v688 = vpop.f32.mrb[0].mxu0
        %v689 = vpop.f32.mrb[0].mxu0
        %v690 = vadd.f32 0.0, %v689
        %v691 = vpop.f32.mrb[0].mxu0
        %692 = vmatprep.mubr.bf16.mxu0 %v523
        %693 = vmatmul.mubr.bf16.gmra.mrb[0].mxu0 %v522
        %v694 = vpop.f32.mrb[0].mxu0
        %v695 = vadd.f32 0.0, %v694
        %v696 = vpop.f32.mrb[0].mxu0
        %v697 = vpop.f32.mrb[0].mxu0
        %v698 = vpop.f32.mrb[0].mxu0
        %699 = vdwg.mxu0
        %v700 = vadd.f32 %v517, %v687
        %v701 = vadd.f32 %v518, %v690
        %v702 = vadd.f32 %v519, %v695
        %703 = vst [vmem:[#allocation2] sm:$0xff] %v700
        %704 = vst [vmem:[#allocation2 + $0x8] sm:$0xff] %v701
        %705 = vst [vmem:[#allocation2 + $0x10] sm:$0xff] %v702
        %p706 = scmp.eq.s32.totalorder %s26, 1
        // Predicated region
        $region57: #{tpu_custom_call.1} parent=39 // pred_check
          %p707 = pneg %p706
        $region58: #{tpu_custom_call.1} parent=39 // pred_check_branch
          %709 = sbr.rel (%p707) target = $region60
        $region59: #{tpu_custom_call.1} parent=39 // pred_region
          %v710 = vld [vmem:[#allocation2] sm:$0xff]
          %v711 = vld [vmem:[#allocation2 + $0x8] sm:$0xff]
          %v712 = vld [vmem:[#allocation2 + $0x10] sm:$0xff]
          %v713 = vld [vmem:[%s4] sm:$0x1]
          %v715 = vlaneseq
          %v716 = vshrl.u32 %v715, 7
          %v717 = vsub.s32 0, %v716
          %v718 = vrot.slane %v713, %v717
          %v720 = vadd.f32 %v710, %v718
          %v721 = vadd.f32 %v711, %v718
          %v722 = vadd.f32 %v712, %v718
          %723 = vst [vmem:[#allocation9] sm:$0xff] %v720
          %724 = vst [vmem:[#allocation9 + $0x8] sm:$0xff] %v721
          %725 = vst [vmem:[#allocation9 + $0x10] sm:$0xff] %v722
        $region60: #{tpu_custom_call.1} parent=39 // pred_fallthru
          _
        // Predicated region
        $region61: #{tpu_custom_call.1} parent=39 // pred_check
          %p726 = pneg %p176
        $region62: #{tpu_custom_call.1} parent=39 // pred_check_branch
          %728 = sbr.rel (%p726) target = $region64
        $region63: #{tpu_custom_call.1} parent=39 // pred_region
          %s729 = smul.u32 3, %s25
          %s731 = ssub.s32 384, 384
          %732 = vsyncadd [#allocation5], %s731
          %s733 = smul.addr %s729, 128
          %s734 = scalar_lea.hbm %s5, %s733
          %s735 = sshll.u32 [#allocation9], 4
          %s736 = int_to_ptr.vmem [resolvable:$true] %s735
          %741 = dma.vmem_to_hbm [thread:$0]  %s736, 384, %s734, [#allocation5], 128, 128, 8
        $region64: #{tpu_custom_call.1} parent=39 // pred_fallthru
          _
        // Predicated region
        $region65: #{tpu_custom_call.1} parent=39 // pred_check
          %p742 = pneg %p176
        $region66: #{tpu_custom_call.1} parent=39 // pred_check_branch
          %744 = sbr.rel (%p742) target = $region68
        $region67: #{tpu_custom_call.1} parent=39 // pred_region
          %745 = dma.done [#allocation5], 384
        $region68: #{tpu_custom_call.1} parent=39 // pred_fallthru
          _
      $region40: #{tpu_custom_call.1} parent=5 // pred_fallthru
        _
      %p746 = scmp.le.s32.totalorder 2, %s16
      // Predicated region
      $region69: #{tpu_custom_call.1} parent=5 // pred_check
        %p747 = pneg %p746
      $region70: #{tpu_custom_call.1} parent=5 // pred_check_branch
        %749 = sbr.rel (%p747) target = $region72
      $region71: #{tpu_custom_call.1} parent=5 // pred_region
        %s750 = ssub.s32 %s16, 2
      $region72: #{tpu_custom_call.1} parent=5 // pred_fallthru
        _
    $region6: #{tpu_custom_call.1} parent=1 // loop_footer
      %s20 = sadd.s32 1, %s16
    $region7: #{tpu_custom_call.1} parent=1 // loop_footer_branch
      %15 = sbr.rel target = $region3
    $region8: #{tpu_custom_call.1} parent=1 // loop_exit
      _
    %751 = vsyncpa [#allocation4], 1
    %s752 = scalar_lea.sflag [#allocation4], 1
    %753 = vsyncpa %s752, 1
    %754 = vsyncpa [#allocation7], 1
    %s755 = scalar_lea.sflag [#allocation7], 1
    %756 = vsyncpa %s755, 1
    %757 = vsyncpa [#allocation5], 1
    %s758 = scalar_lea.sflag [#allocation5], 1
    %759 = vsyncpa %s758, 1

</llo_original>
